<compile_context>
chip_gen: v6e
topology: v6e:2x2x1
jax: 0.10.0
libtpu: 0.0.40
codegen_flags: <defaults>
</compile_context>

<pallas_src>
import functools

import jax
import jax.numpy as jnp
from jax import lax
from jax.experimental import pallas as pl
from jax.experimental.pallas import tpu as pltpu


def _round_up(x, m):
    return (x + m - 1) // m * m


# ----------------------------------------------------------------------------
# Fused kernel:
#   stem conv tile (im2col rows @ W, MXU) + folded BN + ReLU
#   -> global-average-pool accumulation over the spatial grid axis (scratch)
#   -> per-image epilogue at the last spatial tile:
#        pooled @ (fc_w @ w2) + (fc_b @ w2 + b2) -> ReLU -> @ w3 + b3
# ----------------------------------------------------------------------------
def _fused_net_kernel(patches_ref, w_ref, scale_ref, bias_ref,
                      wf_ref, bf_ref, w3_ref, b3_ref,
                      out_ref, acc_ref, *, tp, p_true, p_pad):
    p = pl.program_id(1)

    @pl.when(p == 0)
    def _init():
        acc_ref[...] = jnp.zeros_like(acc_ref)

    x = patches_ref[0]                                              # (TP, Kp) bf16
    y = jnp.dot(x, w_ref[...], preferred_element_type=jnp.float32)  # (TP, Cp) f32
    y = jnp.maximum(y * scale_ref[...] + bias_ref[...], 0.0)        # folded BN + ReLU

    if p_pad != p_true:   # mask rows that only exist because of spatial padding
        row = p * tp + lax.broadcasted_iota(jnp.int32, (tp, 1), 0)
        y = jnp.where(row < p_true, y, 0.0)

    acc_ref[...] += jnp.sum(y, axis=0, keepdims=True)               # (1, Cp)

    @pl.when(p == pl.num_programs(1) - 1)
    def _epilogue():
        pooled = acc_ref[...] * (1.0 / p_true)                      # global avg pool
        h = jnp.dot(pooled, wf_ref[...],
                    preferred_element_type=jnp.float32) + bf_ref[...]   # fc+layer2 folded
        h = jnp.maximum(h, 0.0)                                     # ReLU
        o = jnp.dot(h, w3_ref[...],
                    preferred_element_type=jnp.float32) + b3_ref[...]   # layer3
        out_ref[...] = o.reshape(out_ref.shape).astype(out_ref.dtype)


def fused_net_pallas(patches, w_flat, bn_scale, bn_bias, w_fold, b_fold, w3, b3):
    n, p_true, kp = patches.shape
    cp = w_flat.shape[1]
    h2 = w_fold.shape[1]
    ncp = w3.shape[1]

    # Spatial tile: largest multiple of 8 up to 512 rows; pad P to a multiple.
    # (512 bf16 rows x 256 K ~= 256 KiB per buffer -> fits every generation's
    # scoped VMEM default with double-buffering, including v7x / v5e.)
    tp = min(512, _round_up(p_true, 8))
    p_pad = _round_up(p_true, tp)
    if p_pad != p_true:
        patches = jnp.pad(patches, ((0, 0), (0, p_pad - p_true), (0, 0)))

    grid = (n, p_pad // tp)
    kernel = functools.partial(_fused_net_kernel, tp=tp, p_true=p_true, p_pad=p_pad)

    out = pl.pallas_call(
        kernel,
        out_shape=jax.ShapeDtypeStruct((n, 1, ncp), jnp.float32),
        grid=grid,
        in_specs=[
            pl.BlockSpec((1, tp, kp), lambda b, p: (b, p, 0)),   # patch tile
            pl.BlockSpec((kp, cp), lambda b, p: (0, 0)),         # conv weight (resident)
            pl.BlockSpec((1, cp), lambda b, p: (0, 0)),          # folded BN scale
            pl.BlockSpec((1, cp), lambda b, p: (0, 0)),          # folded BN bias
            pl.BlockSpec((cp, h2), lambda b, p: (0, 0)),         # folded fc@layer2 W
            pl.BlockSpec((1, h2), lambda b, p: (0, 0)),          # folded fc@layer2 b
            pl.BlockSpec((h2, ncp), lambda b, p: (0, 0)),        # layer3 W (padded)
            pl.BlockSpec((1, ncp), lambda b, p: (0, 0)),         # layer3 b (padded)
        ],
        out_specs=pl.BlockSpec((1, 1, ncp), lambda b, p: (b, 0, 0)),
        scratch_shapes=[pltpu.VMEM((1, cp), jnp.float32)],
        compiler_params=pltpu.CompilerParams(
            dimension_semantics=("parallel", "arbitrary")),
    )(patches, w_flat, bn_scale, bn_bias, w_fold, b_fold, w3, b3)
    return out[:, 0, :]


# ----------------------------------------------------------------------------
# Glue: im2col (pure JAX layout shuffle; the matmul itself runs in the kernel)
# TODO(synk): gather the 49 conv taps inside the kernel from the padded NHWC
# input (strided loads) instead of materializing the im2col matrix in HBM.
# ----------------------------------------------------------------------------
def im2col_nhwc(x, kh, kw, stride, pad):
    x = jnp.pad(x, ((0, 0), (pad, pad), (pad, pad), (0, 0)))
    n, h, w, c = x.shape
    oh = (h - kh) // stride + 1
    ow = (w - kw) // stride + 1
    cols = []
    for i in range(kh):
        for j in range(kw):
            cols.append(x[:, i:i + stride * oh:stride,
                          j:j + stride * ow:stride, :])
    patches = jnp.concatenate(cols, axis=-1)          # (N, oh, ow, kh*kw*C)
    return patches.reshape(n, oh * ow, kh * kw * c), oh, ow


# ----------------------------------------------------------------------------
# Parameters (deterministic, synthetic — no checkpoint load)
# ----------------------------------------------------------------------------
def init_params(key, num_classes, stem_cout=64, num_features=1000, hidden=512):
    ks = jax.random.split(key, 8)
    s = 0.05
    return {
        # resnet stem conv: PyTorch layout (Cout, Cin, kh, kw)
        "conv_w": jax.random.normal(ks[0], (stem_cout, 3, 7, 7), jnp.float32) * s,
        # folded BN (gamma/sqrt(var+eps), beta - mean*scale)
        "bn_scale": 1.0 + 0.1 * jax.random.normal(ks[1], (1, stem_cout), jnp.float32),
        "bn_bias": 0.1 * jax.random.normal(ks[2], (1, stem_cout), jnp.float32),
        # resnet.fc  (stand-in: stem_cout -> 1000 so numFeatures == 1000)
        "fc_w": jax.random.normal(ks[3], (stem_cout, num_features), jnp.float32) * s,
        "fc_b": jnp.zeros((1, num_features), jnp.float32),
        # self.layer2 = Linear(1000, 512)
        "w2": jax.random.normal(ks[4], (num_features, hidden), jnp.float32) * s,
        "b2": 0.01 * jax.random.normal(ks[5], (1, hidden), jnp.float32),
        # self.layer3 = Linear(512, num_classes)
        "w3": jax.random.normal(ks[6], (hidden, num_classes), jnp.float32) * s,
        "b3": 0.01 * jax.random.normal(ks[7], (1, num_classes), jnp.float32),
    }


# ----------------------------------------------------------------------------
# Forward (mirrors Net.forward)
# ----------------------------------------------------------------------------
def net_forward(params, x_nchw):
    x = jnp.transpose(x_nchw, (0, 2, 3, 1))                       # NCHW -> NHWC

    patches, _, _ = im2col_nhwc(x, 7, 7, stride=2, pad=3)         # (N, P, K) f32
    _, _, k = patches.shape

    cout = params["conv_w"].shape[0]
    nc = params["w3"].shape[1]
    k_pad = _round_up(k, 128)        # 147 -> 256 : dense MXU K dimension
    c_pad = _round_up(cout, 128)     # 64  -> 128 : lane-dense channels
    nc_pad = _round_up(nc, 128)      # 10  -> 128 : lane-dense output store

    # bf16 operands (f32 accumulation in-kernel), zero-padded to tile multiples.
    patches = jnp.pad(patches, ((0, 0), (0, 0), (0, k_pad - k))).astype(jnp.bfloat16)

    # conv weight (Cout, Cin, kh, kw) -> (kh*kw*Cin, Cout), padded.
    w = jnp.transpose(params["conv_w"], (2, 3, 1, 0)).reshape(k, cout)
    w_flat = jnp.pad(w, ((0, k_pad - k), (0, c_pad - cout))).astype(jnp.bfloat16)
    bn_scale = jnp.pad(params["bn_scale"], ((0, 0), (0, c_pad - cout)))
    bn_bias = jnp.pad(params["bn_bias"], ((0, 0), (0, c_pad - cout)))

    # Fold resnet.fc and layer2 (no nonlinearity between them in Net.forward);
    # drops the 1000-wide intermediate from the kernel hot path.
    w_fold = jnp.pad(params["fc_w"] @ params["w2"], ((0, c_pad - cout), (0, 0)))
    b_fold = params["fc_b"] @ params["w2"] + params["b2"]

    w3 = jnp.pad(params["w3"], ((0, 0), (0, nc_pad - nc)))
    b3 = jnp.pad(params["b3"], ((0, 0), (0, nc_pad - nc)))

    out = fused_net_pallas(patches, w_flat, bn_scale, bn_bias,
                           w_fold, b_fold, w3, b3)
    return out[:, :nc]                                            # (N, num_classes)


# Pure-JAX reference (f32, unfused) for a correctness check.
def net_reference(params, x_nchw):
    x = jnp.transpose(x_nchw, (0, 2, 3, 1))
    patches, _, _ = im2col_nhwc(x, 7, 7, stride=2, pad=3)
    cout = params["conv_w"].shape[0]
    w = jnp.transpose(params["conv_w"], (2, 3, 1, 0)).reshape(-1, cout)
    feat = patches @ w
    feat = jnp.maximum(feat * params["bn_scale"] + params["bn_bias"], 0.0)
    pooled = feat.mean(axis=1)
    f = pooled @ params["fc_w"] + params["fc_b"]
    h = jnp.maximum(f @ params["w2"] + params["b2"], 0.0)
    return h @ params["w3"] + params["b3"]


if __name__ == "__main__":
    num_classes = 10
    im_height = im_width = 16
    batch = 2

    key = jax.random.PRNGKey(0)
    k_x, k_p = jax.random.split(key)
    x = jax.random.normal(k_x, (batch, 3, im_height, im_width), jnp.float32)
    params = init_params(k_p, num_classes)

    out = jax.jit(net_forward)(params, x)
    out = jax.block_until_ready(out)

    assert out.shape == (batch, num_classes)
    assert jnp.all(jnp.isfinite(out))

    ref = net_reference(params, x)
    err = float(jnp.max(jnp.abs(out - ref)))
    assert err < 5e-2, f"kernel vs reference max abs err = {err}"

    print("KERNEL_OK")
</pallas_src>

<mosaic_0001>
module attributes {stable_mosaic.version = 11 : i64} {
  func.func @_fused_net_kernel(%arg0: i32, %arg1: i32, %arg2: memref<1x64x256xbf16, #tpu.memory_space<vmem>>, %arg3: memref<256x128xbf16, #tpu.memory_space<vmem>>, %arg4: memref<1x128xf32, #tpu.memory_space<vmem>>, %arg5: memref<1x128xf32, #tpu.memory_space<vmem>>, %arg6: memref<128x512xf32, #tpu.memory_space<vmem>>, %arg7: memref<1x512xf32, #tpu.memory_space<vmem>>, %arg8: memref<512x128xf32, #tpu.memory_space<vmem>>, %arg9: memref<1x128xf32, #tpu.memory_space<vmem>>, %arg10: memref<1x1x128xf32, #tpu.memory_space<vmem>>, %arg11: memref<1x128xf32, #tpu.memory_space<vmem>>) attributes {dimension_semantics = [#tpu.dimension_semantics<parallel>, #tpu.dimension_semantics<arbitrary>], iteration_bounds = array<i64: 2, 1>, scalar_prefetch = 0 : i64, scratch_operands = 1 : i64, tpu.core_type = #tpu.core_type<tc>, window_params = [{transform_indices = @transform_0, window_bounds = array<i64: 1, 64, 256>}, {pipeline_mode = #tpu.pipeline_mode<synchronous>, transform_indices = @transform_1, window_bounds = array<i64: 256, 128>}, {pipeline_mode = #tpu.pipeline_mode<synchronous>, transform_indices = @transform_2, window_bounds = array<i64: 1, 128>}, {pipeline_mode = #tpu.pipeline_mode<synchronous>, transform_indices = @transform_3, window_bounds = array<i64: 1, 128>}, {pipeline_mode = #tpu.pipeline_mode<synchronous>, transform_indices = @transform_4, window_bounds = array<i64: 128, 512>}, {pipeline_mode = #tpu.pipeline_mode<synchronous>, transform_indices = @transform_5, window_bounds = array<i64: 1, 512>}, {pipeline_mode = #tpu.pipeline_mode<synchronous>, transform_indices = @transform_6, window_bounds = array<i64: 512, 128>}, {pipeline_mode = #tpu.pipeline_mode<synchronous>, transform_indices = @transform_7, window_bounds = array<i64: 1, 128>}, {transform_indices = @transform_8, window_bounds = array<i64: 1, 1, 128>}]} {
    %c0_i32 = arith.constant 0 : i32
    %0 = arith.cmpi eq, %arg1, %c0_i32 : i32
    %1 = arith.extui %0 : i1 to i32
    %c0_i32_0 = arith.constant 0 : i32
    %2 = arith.cmpi ne, %1, %c0_i32_0 : i32
    scf.if %2 {
      %cst_17 = arith.constant 0.000000e+00 : f32
      %23 = vector.broadcast %cst_17 : f32 to vector<1x128xf32>
      %c0_18 = arith.constant 0 : index
      %c0_19 = arith.constant 0 : index
      %24 = vector.load %arg11[%c0_18, %c0_19] : memref<1x128xf32, #tpu.memory_space<vmem>>, vector<1x128xf32>
      tpu.vector_store %arg11[%c0_18, %c0_19], %23 {strides = array<i32>} : memref<1x128xf32, #tpu.memory_space<vmem>>, vector<1x128xf32>,
    } else {
    }
    %c0 = arith.constant 0 : index
    %c0_1 = arith.constant 0 : index
    %c0_2 = arith.constant 0 : index
    %3 = vector.load %arg2[%c0, %c0_1, %c0_2] : memref<1x64x256xbf16, #tpu.memory_space<vmem>>, vector<1x64x256xbf16>
    %4 = vector.shape_cast %3 : vector<1x64x256xbf16> to vector<64x256xbf16>
    %c0_3 = arith.constant 0 : index
    %c0_4 = arith.constant 0 : index
    %5 = vector.load %arg3[%c0_3, %c0_4] : memref<256x128xbf16, #tpu.memory_space<vmem>>, vector<256x128xbf16>
    %cst = arith.constant dense<0.000000e+00> : vector<64x128xf32>
    %6 = tpu.matmul %4, %5, %cst {dimension_numbers = #tpu.dot_dimension_numbers<[1], [0], [0], [1], [0, 0, 1, 1], [], []>} : vector<64x256xbf16>, vector<256x128xbf16>, vector<64x128xf32> -> vector<64x128xf32>
    %c0_5 = arith.constant 0 : index
    %c0_6 = arith.constant 0 : index
    %7 = vector.load %arg4[%c0_5, %c0_6] : memref<1x128xf32, #tpu.memory_space<vmem>>, vector<1x128xf32>
    %8 = vector.broadcast %7 : vector<1x128xf32> to vector<64x128xf32>
    %9 = arith.mulf %6, %8 : vector<64x128xf32>
    %c0_7 = arith.constant 0 : index
    %c0_8 = arith.constant 0 : index
    %10 = vector.load %arg5[%c0_7, %c0_8] : memref<1x128xf32, #tpu.memory_space<vmem>>, vector<1x128xf32>
    %11 = vector.broadcast %10 : vector<1x128xf32> to vector<64x128xf32>
    %12 = arith.addf %9, %11 : vector<64x128xf32>
    %cst_9 = arith.constant 0.000000e+00 : f32
    %13 = vector.broadcast %cst_9 : f32 to vector<64x128xf32>
    %14 = arith.maximumf %12, %13 : vector<64x128xf32>
    %c0_10 = arith.constant 0 : index
    %c0_11 = arith.constant 0 : index
    %15 = vector.load %arg11[%c0_10, %c0_11] : memref<1x128xf32, #tpu.memory_space<vmem>>, vector<1x128xf32>
    %cst_12 = arith.constant dense<0.000000e+00> : vector<128xf32>
    %16 = vector.multi_reduction <add>, %14, %cst_12 [0] : vector<64x128xf32> to vector<128xf32>
    %17 = vector.shape_cast %16 : vector<128xf32> to vector<1x128xf32>
    %18 = arith.addf %15, %17 : vector<1x128xf32>
    %c0_13 = arith.constant 0 : index
    %c0_14 = arith.constant 0 : index
    %19 = vector.load %arg11[%c0_13, %c0_14] : memref<1x128xf32, #tpu.memory_space<vmem>>, vector<1x128xf32>
    tpu.vector_store %arg11[%c0_13, %c0_14], %18 {strides = array<i32>} : memref<1x128xf32, #tpu.memory_space<vmem>>, vector<1x128xf32>,
    %c0_i32_15 = arith.constant 0 : i32
    %20 = arith.cmpi eq, %arg1, %c0_i32_15 : i32
    %21 = arith.extui %20 : i1 to i32
    %c0_i32_16 = arith.constant 0 : i32
    %22 = arith.cmpi ne, %21, %c0_i32_16 : i32
    scf.if %22 {
      %c0_17 = arith.constant 0 : index
      %c0_18 = arith.constant 0 : index
      %23 = vector.load %arg11[%c0_17, %c0_18] : memref<1x128xf32, #tpu.memory_space<vmem>>, vector<1x128xf32>
      %cst_19 = arith.constant 1.562500e-02 : f32
      %24 = vector.broadcast %cst_19 : f32 to vector<1x128xf32>
      %25 = arith.mulf %23, %24 : vector<1x128xf32>
      %c0_20 = arith.constant 0 : index
      %c0_21 = arith.constant 0 : index
      %26 = vector.load %arg6[%c0_20, %c0_21] : memref<128x512xf32, #tpu.memory_space<vmem>>, vector<128x512xf32>
      %cst_22 = arith.constant dense<0.000000e+00> : vector<1x512xf32>
      %27 = tpu.matmul %25, %26, %cst_22 {dimension_numbers = #tpu.dot_dimension_numbers<[1], [0], [0], [1], [0, 0, 1, 1], [], []>} : vector<1x128xf32>, vector<128x512xf32>, vector<1x512xf32> -> vector<1x512xf32>
      %c0_23 = arith.constant 0 : index
      %c0_24 = arith.constant 0 : index
      %28 = vector.load %arg7[%c0_23, %c0_24] : memref<1x512xf32, #tpu.memory_space<vmem>>, vector<1x512xf32>
      %29 = arith.addf %27, %28 : vector<1x512xf32>
      %cst_25 = arith.constant 0.000000e+00 : f32
      %30 = vector.broadcast %cst_25 : f32 to vector<1x512xf32>
      %31 = arith.maximumf %29, %30 : vector<1x512xf32>
      %c0_26 = arith.constant 0 : index
      %c0_27 = arith.constant 0 : index
      %32 = vector.load %arg8[%c0_26, %c0_27] : memref<512x128xf32, #tpu.memory_space<vmem>>, vector<512x128xf32>
      %cst_28 = arith.constant dense<0.000000e+00> : vector<1x128xf32>
      %33 = tpu.matmul %31, %32, %cst_28 {dimension_numbers = #tpu.dot_dimension_numbers<[1], [0], [0], [1], [0, 0, 1, 1], [], []>} : vector<1x512xf32>, vector<512x128xf32>, vector<1x128xf32> -> vector<1x128xf32>
      %c0_29 = arith.constant 0 : index
      %c0_30 = arith.constant 0 : index
      %34 = vector.load %arg9[%c0_29, %c0_30] : memref<1x128xf32, #tpu.memory_space<vmem>>, vector<1x128xf32>
      %35 = arith.addf %33, %34 : vector<1x128xf32>
      %36 = vector.shape_cast %35 : vector<1x128xf32> to vector<1x1x128xf32>
      %c0_31 = arith.constant 0 : index
      %c0_32 = arith.constant 0 : index
      %c0_33 = arith.constant 0 : index
      %37 = vector.load %arg10[%c0_31, %c0_32, %c0_33] : memref<1x1x128xf32, #tpu.memory_space<vmem>>, vector<1x1x128xf32>
      tpu.vector_store %arg10[%c0_31, %c0_32, %c0_33], %36 {strides = array<i32>} : memref<1x1x128xf32, #tpu.memory_space<vmem>>, vector<1x1x128xf32>,
    } else {
    }
    return
  }
  func.func @transform_0(%arg0: i32, %arg1: i32) -> (i32, i32, i32) {
    %c0_i32 = arith.constant 0 : i32
    %c0_i32_0 = arith.constant 0 : i32
    return %arg0, %arg1, %c0_i32 : i32, i32, i32
  }
  func.func @transform_1(%arg0: i32, %arg1: i32) -> (i32, i32) {
    %c0_i32 = arith.constant 0 : i32
    %c0_i32_0 = arith.constant 0 : i32
    %c0_i32_1 = arith.constant 0 : i32
    return %c0_i32, %c0_i32_0 : i32, i32
  }
  func.func @transform_2(%arg0: i32, %arg1: i32) -> (i32, i32) {
    %c0_i32 = arith.constant 0 : i32
    %c0_i32_0 = arith.constant 0 : i32
    %c0_i32_1 = arith.constant 0 : i32
    return %c0_i32, %c0_i32_0 : i32, i32
  }
  func.func @transform_3(%arg0: i32, %arg1: i32) -> (i32, i32) {
    %c0_i32 = arith.constant 0 : i32
    %c0_i32_0 = arith.constant 0 : i32
    %c0_i32_1 = arith.constant 0 : i32
    return %c0_i32, %c0_i32_0 : i32, i32
  }
  func.func @transform_4(%arg0: i32, %arg1: i32) -> (i32, i32) {
    %c0_i32 = arith.constant 0 : i32
    %c0_i32_0 = arith.constant 0 : i32
    %c0_i32_1 = arith.constant 0 : i32
    return %c0_i32, %c0_i32_0 : i32, i32
  }
  func.func @transform_5(%arg0: i32, %arg1: i32) -> (i32, i32) {
    %c0_i32 = arith.constant 0 : i32
    %c0_i32_0 = arith.constant 0 : i32
    %c0_i32_1 = arith.constant 0 : i32
    return %c0_i32, %c0_i32_0 : i32, i32
  }
  func.func @transform_6(%arg0: i32, %arg1: i32) -> (i32, i32) {
    %c0_i32 = arith.constant 0 : i32
    %c0_i32_0 = arith.constant 0 : i32
    %c0_i32_1 = arith.constant 0 : i32
    return %c0_i32, %c0_i32_0 : i32, i32
  }
  func.func @transform_7(%arg0: i32, %arg1: i32) -> (i32, i32) {
    %c0_i32 = arith.constant 0 : i32
    %c0_i32_0 = arith.constant 0 : i32
    %c0_i32_1 = arith.constant 0 : i32
    return %c0_i32, %c0_i32_0 : i32, i32
  }
  func.func @transform_8(%arg0: i32, %arg1: i32) -> (i32, i32, i32) {
    %c0_i32 = arith.constant 0 : i32
    %c0_i32_0 = arith.constant 0 : i32
    %c0_i32_1 = arith.constant 0 : i32
    return %arg0, %c0_i32, %c0_i32_0 : i32, i32, i32
  }
}

</mosaic_0001>

<llo_original>
// kernel: net_forward.1
$region0: #{net_forward.1}
  #allocation0 [shape = 'u32[]', space=smem, size = 0x4, offset = 0x4, fixed_abs, tag = 'smem constant byte address 0x4 - core index']
  #allocation1 [shape = 'u32[144,128]{1,0:T(1,128)}', space=vmem, size = 0x12000, scoped, tag = 'internal scratch']
  #allocation2 [shape = 'f32[1,128]{1,0:T(1,128)}', space=vmem, size = 0x200, scoped, tag = 'scratch operand']
  %s0 = inlined_call_operand.vmem [shape: bf16[2,64,256], index: 0, kind: input, shape index: {}]
  %s1 = inlined_call_operand.vmem [shape: bf16[256,128], index: 1, kind: input, shape index: {}]
  %s2 = inlined_call_operand.vmem [shape: f32[1,128], index: 2, kind: input, shape index: {}]
  %s3 = inlined_call_operand.vmem [shape: f32[1,128], index: 3, kind: input, shape index: {}]
  %s4 = inlined_call_operand.vmem [shape: f32[128,512], index: 4, kind: input, shape index: {}]
  %s5 = inlined_call_operand.vmem [shape: f32[1,512], index: 5, kind: input, shape index: {}]
  %s6 = inlined_call_operand.vmem [shape: f32[512,128], index: 6, kind: input, shape index: {}]
  %s7 = inlined_call_operand.vmem [shape: f32[1,128], index: 7, kind: input, shape index: {}]
  %s8 = inlined_call_operand.hbm [shape: f32[2,1,128], index: 8, kind: output, shape index: {}]
  %s9 = sld [smem:[#allocation0]]
  $region73: #{net_forward.1} parent=0
    _
  %s11 = ssub.s32 1, %s9
  %s12 = scalar_select 0, %s11, %s9
  $region1: #{net_forward.1} parent=0
    #allocation3 [shape = 'u8[1024]{0}', space=vmem, size = 0x400, scoped, tag = 'output window, operand 0']
    #allocation4 [shape = 's32[2]{0}', space=sflag, size = 0x8, scoped, tag = 'scoped memory for net_forward.1']
    %13 = vsyncpa [#allocation4], 0
    %s14 = scalar_lea.sflag [#allocation4], 1
    %15 = vsyncpa %s14, 0
    loop: start=0, step=1, limit=4
    $region2: #{net_forward.1} parent=1 // loop_pre_header
      _
    $region3: #{net_forward.1} parent=1 // loop_header
      %s17 = sphi 0, %s21
      %p18 = scmp.ge.s32.totalorder %s17, 4
      %s24 = sphi 0, %s36
      %s25 = sphi 0, %s32
      %s26 = sphi 0, %s24
      %s27 = sphi 0, %s25
      %s28 = sphi 0, %s26
      %s29 = sphi 0, %s27
      %s41 = sphi 0, %s43
      %s44 = sphi 0, %s41
      %s45 = sphi 0, %s44
      %s61 = sphi 0, %s45
      %s65 = sphi 0, %s65
      %s67 = sphi 0, %s65
      %s68 = sphi 0, %s67
      %s82 = sphi 0, %s68
      %s86 = sphi 0, %s86
      %s88 = sphi 0, %s86
      %s89 = sphi 0, %s88
      %s103 = sphi 0, %s89
      %s107 = sphi 0, %s107
      %s109 = sphi 0, %s107
      %s110 = sphi 0, %s109
      %s124 = sphi 0, %s110
      %s128 = sphi 0, %s128
      %s130 = sphi 0, %s128
      %s131 = sphi 0, %s130
      %s145 = sphi 0, %s131
      %s149 = sphi 0, %s149
      %s151 = sphi 0, %s149
      %s152 = sphi 0, %s151
      %s166 = sphi 0, %s152
      %s170 = sphi 0, %s170
      %s172 = sphi 0, %s170
      %s173 = sphi 0, %s172
      %s187 = sphi 0, %s173
      %s191 = sphi 0, %s191
      %s193 = sphi 0, %s191
      %s194 = sphi 0, %s193
      %s208 = sphi 0, %s194
      %s214 = sphi 0, %s216
      %s217 = sphi 0, %s214
      %s218 = sphi 0, %s217
      %s234 = sphi 0, %s218
    $region4: #{net_forward.1} parent=1 // loop_header_branch
      %20 = sbr.rel (%p18) target = $region8
    $region5: #{net_forward.1} parent=1 // loop_body
      %s22 = ssub.s32 %s17, 1
      %s23 = ssub.s32 %s17, 2
      %s30 = sadd.s32 1, %s25
      %p31 = scmp.ge.s32.totalorder %s30, 1
      %s32 = scalar_select %p31, 0, %s30
      %s33 = sadd.s32 1, %s24
      %s34 = scalar_select %p31, %s33, %s24
      %p35 = scmp.ge.s32.totalorder %s34, 2
      %s36 = scalar_select %p35, 0, %s34
      %s37 = ssub.s32 %s24, %s36
      %s38 = ssub.s32 %s25, %s32
      %s39 = sor.u32 %s37, %s38
      %p40 = scmp.eq.s32.totalorder %s39, 0
      %s42 = sadd.s32 %s41, 1
      %s43 = scalar_select %p40, %s41, %s42
      %p46 = pneg %p40
      %p47 = scmp.eq.s32.totalorder %s17, 1
      %p48 = por %p46, %p47
      %p49 = scmp.ne.s32.totalorder %s41, %s44
      %p50 = scmp.eq.s32.totalorder %s17, 0
      %p51 = por %p49, %p50
      %p52 = scmp.ne.s32.totalorder %s41, %s44
      %p53 = scmp.eq.s32.totalorder %s22, 1
      %p54 = por %p52, %p53
      %p55 = scmp.ne.s32.totalorder %s44, %s45
      %p56 = scmp.eq.s32.totalorder %s22, 0
      %p57 = por %p55, %p56
      %p58 = scmp.ne.s32.totalorder %s44, %s45
      %p59 = scmp.eq.s32.totalorder %s23, 1
      %p60 = por %p58, %p59
      %p62 = scmp.ne.s32.totalorder %s45, %s61
      %p63 = scmp.eq.s32.totalorder %s23, 0
      %p64 = por %p62, %p63
      %s66 = sadd.s32 %s65, 1
      %p69 = scmp.eq.s32.totalorder %s17, 1
      %p70 = scmp.ne.s32.totalorder %s65, %s67
      %p71 = scmp.eq.s32.totalorder %s17, 0
      %p72 = por %p70, %p71
      %p73 = scmp.ne.s32.totalorder %s65, %s67
      %p74 = scmp.eq.s32.totalorder %s22, 1
      %p75 = por %p73, %p74
      %p76 = scmp.ne.s32.totalorder %s67, %s68
      %p77 = scmp.eq.s32.totalorder %s22, 0
      %p78 = por %p76, %p77
      %p79 = scmp.ne.s32.totalorder %s67, %s68
      %p80 = scmp.eq.s32.totalorder %s23, 1
      %p81 = por %p79, %p80
      %p83 = scmp.ne.s32.totalorder %s68, %s82
      %p84 = scmp.eq.s32.totalorder %s23, 0
      %p85 = por %p83, %p84
      %s87 = sadd.s32 %s86, 1
      %p90 = scmp.eq.s32.totalorder %s17, 1
      %p91 = scmp.ne.s32.totalorder %s86, %s88
      %p92 = scmp.eq.s32.totalorder %s17, 0
      %p93 = por %p91, %p92
      %p94 = scmp.ne.s32.totalorder %s86, %s88
      %p95 = scmp.eq.s32.totalorder %s22, 1
      %p96 = por %p94, %p95
      %p97 = scmp.ne.s32.totalorder %s88, %s89
      %p98 = scmp.eq.s32.totalorder %s22, 0
      %p99 = por %p97, %p98
      %p100 = scmp.ne.s32.totalorder %s88, %s89
      %p101 = scmp.eq.s32.totalorder %s23, 1
      %p102 = por %p100, %p101
      %p104 = scmp.ne.s32.totalorder %s89, %s103
      %p105 = scmp.eq.s32.totalorder %s23, 0
      %p106 = por %p104, %p105
      %s108 = sadd.s32 %s107, 1
      %p111 = scmp.eq.s32.totalorder %s17, 1
      %p112 = scmp.ne.s32.totalorder %s107, %s109
      %p113 = scmp.eq.s32.totalorder %s17, 0
      %p114 = por %p112, %p113
      %p115 = scmp.ne.s32.totalorder %s107, %s109
      %p116 = scmp.eq.s32.totalorder %s22, 1
      %p117 = por %p115, %p116
      %p118 = scmp.ne.s32.totalorder %s109, %s110
      %p119 = scmp.eq.s32.totalorder %s22, 0
      %p120 = por %p118, %p119
      %p121 = scmp.ne.s32.totalorder %s109, %s110
      %p122 = scmp.eq.s32.totalorder %s23, 1
      %p123 = por %p121, %p122
      %p125 = scmp.ne.s32.totalorder %s110, %s124
      %p126 = scmp.eq.s32.totalorder %s23, 0
      %p127 = por %p125, %p126
      %s129 = sadd.s32 %s128, 1
      %p132 = scmp.eq.s32.totalorder %s17, 1
      %p133 = scmp.ne.s32.totalorder %s128, %s130
      %p134 = scmp.eq.s32.totalorder %s17, 0
      %p135 = por %p133, %p134
      %p136 = scmp.ne.s32.totalorder %s128, %s130
      %p137 = scmp.eq.s32.totalorder %s22, 1
      %p138 = por %p136, %p137
      %p139 = scmp.ne.s32.totalorder %s130, %s131
      %p140 = scmp.eq.s32.totalorder %s22, 0
      %p141 = por %p139, %p140
      %p142 = scmp.ne.s32.totalorder %s130, %s131
      %p143 = scmp.eq.s32.totalorder %s23, 1
      %p144 = por %p142, %p143
      %p146 = scmp.ne.s32.totalorder %s131, %s145
      %p147 = scmp.eq.s32.totalorder %s23, 0
      %p148 = por %p146, %p147
      %s150 = sadd.s32 %s149, 1
      %p153 = scmp.eq.s32.totalorder %s17, 1
      %p154 = scmp.ne.s32.totalorder %s149, %s151
      %p155 = scmp.eq.s32.totalorder %s17, 0
      %p156 = por %p154, %p155
      %p157 = scmp.ne.s32.totalorder %s149, %s151
      %p158 = scmp.eq.s32.totalorder %s22, 1
      %p159 = por %p157, %p158
      %p160 = scmp.ne.s32.totalorder %s151, %s152
      %p161 = scmp.eq.s32.totalorder %s22, 0
      %p162 = por %p160, %p161
      %p163 = scmp.ne.s32.totalorder %s151, %s152
      %p164 = scmp.eq.s32.totalorder %s23, 1
      %p165 = por %p163, %p164
      %p167 = scmp.ne.s32.totalorder %s152, %s166
      %p168 = scmp.eq.s32.totalorder %s23, 0
      %p169 = por %p167, %p168
      %s171 = sadd.s32 %s170, 1
      %p174 = scmp.eq.s32.totalorder %s17, 1
      %p175 = scmp.ne.s32.totalorder %s170, %s172
      %p176 = scmp.eq.s32.totalorder %s17, 0
      %p177 = por %p175, %p176
      %p178 = scmp.ne.s32.totalorder %s170, %s172
      %p179 = scmp.eq.s32.totalorder %s22, 1
      %p180 = por %p178, %p179
      %p181 = scmp.ne.s32.totalorder %s172, %s173
      %p182 = scmp.eq.s32.totalorder %s22, 0
      %p183 = por %p181, %p182
      %p184 = scmp.ne.s32.totalorder %s172, %s173
      %p185 = scmp.eq.s32.totalorder %s23, 1
      %p186 = por %p184, %p185
      %p188 = scmp.ne.s32.totalorder %s173, %s187
      %p189 = scmp.eq.s32.totalorder %s23, 0
      %p190 = por %p188, %p189
      %s192 = sadd.s32 %s191, 1
      %p195 = scmp.eq.s32.totalorder %s17, 1
      %p196 = scmp.ne.s32.totalorder %s191, %s193
      %p197 = scmp.eq.s32.totalorder %s17, 0
      %p198 = por %p196, %p197
      %p199 = scmp.ne.s32.totalorder %s191, %s193
      %p200 = scmp.eq.s32.totalorder %s22, 1
      %p201 = por %p199, %p200
      %p202 = scmp.ne.s32.totalorder %s193, %s194
      %p203 = scmp.eq.s32.totalorder %s22, 0
      %p204 = por %p202, %p203
      %p205 = scmp.ne.s32.totalorder %s193, %s194
      %p206 = scmp.eq.s32.totalorder %s23, 1
      %p207 = por %p205, %p206
      %p209 = scmp.ne.s32.totalorder %s194, %s208
      %p210 = scmp.eq.s32.totalorder %s23, 0
      %p211 = por %p209, %p210
      %s212 = ssub.s32 %s24, %s36
      %p213 = scmp.eq.s32.totalorder %s212, 0
      %s215 = sadd.s32 %s214, 1
      %s216 = scalar_select %p213, %s214, %s215
      %p219 = pneg %p213
      %p220 = scmp.eq.s32.totalorder %s17, 1
      %p221 = por %p219, %p220
      %p222 = scmp.ne.s32.totalorder %s214, %s217
      %p223 = scmp.eq.s32.totalorder %s17, 0
      %p224 = por %p222, %p223
      %p225 = scmp.ne.s32.totalorder %s214, %s217
      %p226 = scmp.eq.s32.totalorder %s22, 1
      %p227 = por %p225, %p226
      %p228 = scmp.ne.s32.totalorder %s217, %s218
      %p229 = scmp.eq.s32.totalorder %s22, 0
      %p230 = por %p228, %p229
      %p231 = scmp.ne.s32.totalorder %s217, %s218
      %p232 = scmp.eq.s32.totalorder %s23, 1
      %p233 = por %p231, %p232
      %p235 = scmp.ne.s32.totalorder %s218, %s234
      %p236 = scmp.eq.s32.totalorder %s23, 0
      %p237 = por %p235, %p236
      %p238 = scmp.le.s32.totalorder 1, %s17
      %p239 = scmp.lt.s32.totalorder %s17, 3
      %p240 = pnand %p238, %p239
      %p241 = pneg %p240
      // Predicated region
      $region9: #{net_forward.1} parent=5 // pred_check
        _
      $region10: #{net_forward.1} parent=5 // pred_check_branch
        %243 = sbr.rel (%p240) target = $region12
      $region11: #{net_forward.1} parent=5 // pred_region
        %s244 = ssub.s32 %s17, 1
        // Predicated region
        $region13: #{net_forward.1} parent=11 // pred_check
          %p245 = pneg %p78
        $region14: #{net_forward.1} parent=11 // pred_check_branch
          %247 = sbr.rel (%p245) target = $region16
        $region15: #{net_forward.1} parent=11 // pred_region
          _
        $region16: #{net_forward.1} parent=11 // pred_fallthru
          _
        // Predicated region
        $region17: #{net_forward.1} parent=11 // pred_check
          %p248 = pneg %p99
        $region18: #{net_forward.1} parent=11 // pred_check_branch
          %250 = sbr.rel (%p248) target = $region20
        $region19: #{net_forward.1} parent=11 // pred_region
          _
        $region20: #{net_forward.1} parent=11 // pred_fallthru
          _
        // Predicated region
        $region21: #{net_forward.1} parent=11 // pred_check
          %p251 = pneg %p120
        $region22: #{net_forward.1} parent=11 // pred_check_branch
          %253 = sbr.rel (%p251) target = $region24
        $region23: #{net_forward.1} parent=11 // pred_region
          _
        $region24: #{net_forward.1} parent=11 // pred_fallthru
          _
        // Predicated region
        $region25: #{net_forward.1} parent=11 // pred_check
          %p254 = pneg %p141
        $region26: #{net_forward.1} parent=11 // pred_check_branch
          %256 = sbr.rel (%p254) target = $region28
        $region27: #{net_forward.1} parent=11 // pred_region
          _
        $region28: #{net_forward.1} parent=11 // pred_fallthru
          _
        // Predicated region
        $region29: #{net_forward.1} parent=11 // pred_check
          %p257 = pneg %p162
        $region30: #{net_forward.1} parent=11 // pred_check_branch
          %259 = sbr.rel (%p257) target = $region32
        $region31: #{net_forward.1} parent=11 // pred_region
          _
        $region32: #{net_forward.1} parent=11 // pred_fallthru
          _
        // Predicated region
        $region33: #{net_forward.1} parent=11 // pred_check
          %p260 = pneg %p183
        $region34: #{net_forward.1} parent=11 // pred_check_branch
          %262 = sbr.rel (%p260) target = $region36
        $region35: #{net_forward.1} parent=11 // pred_region
          _
        $region36: #{net_forward.1} parent=11 // pred_fallthru
          _
        // Predicated region
        $region37: #{net_forward.1} parent=11 // pred_check
          %p263 = pneg %p204
        $region38: #{net_forward.1} parent=11 // pred_check_branch
          %265 = sbr.rel (%p263) target = $region40
        $region39: #{net_forward.1} parent=11 // pred_region
          _
        $region40: #{net_forward.1} parent=11 // pred_fallthru
          _
      $region12: #{net_forward.1} parent=5 // pred_fallthru
        _
      %p266 = scmp.lt.s32.totalorder %s17, 2
      // Predicated region
      $region41: #{net_forward.1} parent=5 // pred_check
        %p267 = pneg %p266
      $region42: #{net_forward.1} parent=5 // pred_check_branch
        %269 = sbr.rel (%p267) target = $region44
      $region43: #{net_forward.1} parent=5 // pred_region
        // Predicated region
        $region45: #{net_forward.1} parent=43 // pred_check
          %p270 = pneg %p51
        $region46: #{net_forward.1} parent=43 // pred_check_branch
          %272 = sbr.rel (%p270) target = $region48
        $region47: #{net_forward.1} parent=43 // pred_region
          %s273 = smul.u32 8, %s25
          %p274 = scmp.lt.s32.totalorder %s24, 1
          %s275 = scalar_select %p274, %s24, 1
          %p276 = scmp.lt.s32.totalorder %s273, 7
          %s277 = scalar_select %p276, %s273, 7
          %s278 = smul.addr %s277, 2
          %s279 = smul.addr %s275, 16
          %s280 = sadd.s32 %s278, %s279
          %s281 = smul.addr %s280, 4
          %s282 = scalar_lea.vmem %s0, %s281
          %s283 = smul.u32 8, %s25
        $region48: #{net_forward.1} parent=43 // pred_fallthru
          _
      $region44: #{net_forward.1} parent=5 // pred_fallthru
        _
      %p284 = scmp.le.s32.totalorder 1, %s17
      %p285 = scmp.lt.s32.totalorder %s17, 3
      %p286 = pnand %p284, %p285
      %p287 = pneg %p286
      // Predicated region
      $region49: #{net_forward.1} parent=5 // pred_check
        _
      $region50: #{net_forward.1} parent=5 // pred_check_branch
        %289 = sbr.rel (%p286) target = $region52
      $region51: #{net_forward.1} parent=5 // pred_region
        %s290 = ssub.s32 %s17, 1
        %s291 = smul.u32 8, %s27
        %p292 = scmp.lt.s32.totalorder %s26, 1
        %s293 = scalar_select %p292, %s26, 1
        %p294 = scmp.lt.s32.totalorder %s291, 7
        %s295 = scalar_select %p294, %s291, 7
        %s296 = smul.addr %s295, 2
        %s297 = smul.addr %s293, 16
        %s298 = sadd.s32 %s296, %s297
        %s299 = smul.addr %s298, 4
        %s300 = scalar_lea.vmem %s0, %s299
        %p301 = pneg %p57
        %p302 = pneg %p54
        %p303 = pneg %p78
        %p304 = pneg %p75
        %p305 = pneg %p99
        %p306 = pneg %p96
        %p307 = pneg %p120
        %p308 = pneg %p117
        %p309 = pneg %p141
        %p310 = pneg %p138
        %p311 = pneg %p162
        %p312 = pneg %p159
        %p313 = pneg %p183
        %p314 = pneg %p180
        %p315 = pneg %p204
        %p316 = pneg %p201
        %p317 = pneg %p230
        %p318 = pneg %p227
        %s319 = sand.u32 %s217, 1
        %s320 = scalar_lea.sflag [#allocation4], %s319
        %s321 = sand.u32 %s217, 1
        %s322 = scalar_lea.vmem [#allocation3], %s321
        %s323 = smul.u32 8, %s27
        %p324 = scmp.lt.s32.totalorder %s26, 1
        %s325 = scalar_select %p324, %s26, 1
        %p326 = scmp.lt.s32.totalorder %s323, 7
        %s327 = scalar_select %p326, %s323, 7
        %s328 = smul.addr %s327, 2
        %s329 = smul.addr %s325, 16
        %s330 = sadd.s32 %s328, %s329
        %s331 = smul.addr %s330, 4
        %s332 = scalar_lea.vmem %s0, %s331
        %s333 = smul.u32 8, %s27
        %p335 = scmp.eq.s32.totalorder %s27, 0
        // Predicated region
        $region53: #{net_forward.1} parent=51 // pred_check
          %p336 = pneg %p335
        $region54: #{net_forward.1} parent=51 // pred_check_branch
          %338 = sbr.rel (%p336) target = $region56
        $region55: #{net_forward.1} parent=51 // pred_region
          %339 = vst [vmem:[#allocation2] sm:$0x1] 0.0
        $region56: #{net_forward.1} parent=51 // pred_fallthru
          _
        %v340 = vld [vmem:[%s332] sm:$0xff]
        %v341 = vld [vmem:[%s332 + $0x8] sm:$0xff]
        %v342 = vld [vmem:[%s332 + $0x10] sm:$0xff]
        %v343 = vld [vmem:[%s332 + $0x18] sm:$0xff]
        %v344 = vld [vmem:[%s332 + $0x20] sm:$0xff]
        %v345 = vld [vmem:[%s332 + $0x28] sm:$0xff]
        %v346 = vld [vmem:[%s332 + $0x30] sm:$0xff]
        %v347 = vld [vmem:[%s332 + $0x38] sm:$0xff]
        %v348 = vld [vmem:[%s1] sm:$0xf]
        %v349 = vld [vmem:[%s1 + $0x4] sm:$0xf]
        %v350 = vld [vmem:[%s1 + $0x8] sm:$0xf]
        %v351 = vld [vmem:[%s1 + $0xc] sm:$0xf]
        %v352 = vld [vmem:[%s1 + $0x10] sm:$0xf]
        %v353 = vld [vmem:[%s1 + $0x14] sm:$0xf]
        %v354 = vld [vmem:[%s1 + $0x18] sm:$0xf]
        %v355 = vld [vmem:[%s1 + $0x1c] sm:$0xf]
        %v356 = vld [vmem:[%s1 + $0x20] sm:$0xf]
        %v357 = vld [vmem:[%s1 + $0x24] sm:$0xf]
        %v358 = vld [vmem:[%s1 + $0x28] sm:$0xf]
        %v359 = vld [vmem:[%s1 + $0x2c] sm:$0xf]
        %v360 = vld [vmem:[%s1 + $0x30] sm:$0xf]
        %v361 = vld [vmem:[%s1 + $0x34] sm:$0xf]
        %v362 = vld [vmem:[%s1 + $0x38] sm:$0xf]
        %v363 = vld [vmem:[%s1 + $0x3c] sm:$0xf]
        %v364 = vld [vmem:[%s1 + $0x40] sm:$0xf]
        %v365 = vld [vmem:[%s1 + $0x44] sm:$0xf]
        %v366 = vld [vmem:[%s1 + $0x48] sm:$0xf]
        %v367 = vld [vmem:[%s1 + $0x4c] sm:$0xf]
        %v368 = vld [vmem:[%s1 + $0x50] sm:$0xf]
        %v369 = vld [vmem:[%s1 + $0x54] sm:$0xf]
        %v370 = vld [vmem:[%s1 + $0x58] sm:$0xf]
        %v371 = vld [vmem:[%s1 + $0x5c] sm:$0xf]
        %v372 = vld [vmem:[%s1 + $0x60] sm:$0xf]
        %v373 = vld [vmem:[%s1 + $0x64] sm:$0xf]
        %v374 = vld [vmem:[%s1 + $0x68] sm:$0xf]
        %v375 = vld [vmem:[%s1 + $0x6c] sm:$0xf]
        %v376 = vld [vmem:[%s1 + $0x70] sm:$0xf]
        %v377 = vld [vmem:[%s1 + $0x74] sm:$0xf]
        %v378 = vld [vmem:[%s1 + $0x78] sm:$0xf]
        %v379 = vld [vmem:[%s1 + $0x7c] sm:$0xf]
        %v388 = vunpack.c.l.b16 %v340
        %v389 = vunpack.c.h.b16 %v340
        %v390 = vunpack.c.l.b16 %v341
        %v391 = vunpack.c.h.b16 %v341
        %v392 = vunpack.c.l.b16 %v342
        %v393 = vunpack.c.h.b16 %v342
        %v394 = vunpack.c.l.b16 %v343
        %v395 = vunpack.c.h.b16 %v343
        %v396 = vunpack.c.l.b16 %v344
        %v397 = vunpack.c.h.b16 %v344
        %v398 = vunpack.c.l.b16 %v345
        %v399 = vunpack.c.h.b16 %v345
        %v400 = vunpack.c.l.b16 %v346
        %v401 = vunpack.c.h.b16 %v346
        %v402 = vunpack.c.l.b16 %v347
        %v403 = vunpack.c.h.b16 %v347
        %v404 = vpack.c.b16 %v390, %v388
        %v405 = vpack.c.b16 %v391, %v389
        %v406 = vpack.c.b16 %v394, %v392
        %v407 = vpack.c.b16 %v395, %v393
        %v408 = vpack.c.b16 %v398, %v396
        %v409 = vpack.c.b16 %v399, %v397
        %v410 = vpack.c.b16 %v402, %v400
        %v411 = vpack.c.b16 %v403, %v401
        %v452 = vunpack.c.l.b16 %v348
        %v453 = vunpack.c.l.b16 %v349
        %v454 = vunpack.c.l.b16 %v350
        %v455 = vunpack.c.l.b16 %v351
        %v456 = vunpack.c.l.b16 %v352
        %v457 = vunpack.c.l.b16 %v353
        %v458 = vunpack.c.l.b16 %v354
        %v459 = vunpack.c.l.b16 %v355
        %v460 = vunpack.c.l.b16 %v356
        %v461 = vunpack.c.l.b16 %v357
        %v462 = vunpack.c.l.b16 %v358
        %v463 = vunpack.c.l.b16 %v359
        %v464 = vunpack.c.l.b16 %v360
        %v465 = vunpack.c.l.b16 %v361
        %v466 = vunpack.c.l.b16 %v362
        %v467 = vunpack.c.l.b16 %v363
        %v468 = vunpack.c.l.b16 %v364
        %v469 = vunpack.c.l.b16 %v365
        %v470 = vunpack.c.l.b16 %v366
        %v471 = vunpack.c.l.b16 %v367
        %v472 = vunpack.c.l.b16 %v368
        %v473 = vunpack.c.l.b16 %v369
        %v474 = vunpack.c.l.b16 %v370
        %v475 = vunpack.c.l.b16 %v371
        %v476 = vunpack.c.l.b16 %v372
        %v477 = vunpack.c.l.b16 %v373
        %v478 = vunpack.c.l.b16 %v374
        %v479 = vunpack.c.l.b16 %v375
        %v480 = vunpack.c.l.b16 %v376
        %v481 = vunpack.c.l.b16 %v377
        %v482 = vunpack.c.l.b16 %v378
        %v483 = vunpack.c.l.b16 %v379
        %v484 = vpack.c.b16 %v453, %v452
        %v485 = vpack.c.b16 %v455, %v454
        %v486 = vpack.c.b16 %v457, %v456
        %v487 = vpack.c.b16 %v459, %v458
        %v488 = vpack.c.b16 %v461, %v460
        %v489 = vpack.c.b16 %v463, %v462
        %v490 = vpack.c.b16 %v465, %v464
        %v491 = vpack.c.b16 %v467, %v466
        %v492 = vpack.c.b16 %v469, %v468
        %v493 = vpack.c.b16 %v471, %v470
        %v494 = vpack.c.b16 %v473, %v472
        %v495 = vpack.c.b16 %v475, %v474
        %v496 = vpack.c.b16 %v477, %v476
        %v497 = vpack.c.b16 %v479, %v478
        %v498 = vpack.c.b16 %v481, %v480
        %v499 = vpack.c.b16 %v483, %v482
        %516 = vmatprep.subr.bf16.mxu0 0
        %517 = vmatpush1.bf16.msra.mxu0 %v491
        %518 = vmatprep.subr.bf16.mxu0 0
        %519 = vmatpush1.bf16.msra.mxu0 %v490
        %520 = vmatprep.subr.bf16.mxu0 0
        %521 = vmatpush1.bf16.msra.mxu0 %v489
        %522 = vmatprep.subr.bf16.mxu0 0
        %523 = vmatpush1.bf16.msra.mxu0 %v488
        %524 = vmatprep.subr.bf16.mxu0 0
        %525 = vmatpush1.bf16.msra.mxu0 %v487
        %526 = vmatprep.subr.bf16.mxu0 0
        %527 = vmatpush1.bf16.msra.mxu0 %v486
        %528 = vmatprep.subr.bf16.mxu0 0
        %529 = vmatpush1.bf16.msra.mxu0 %v485
        %530 = vmatprep.subr.bf16.mxu0 0
        %531 = vmatpush1.bf16.msra.mxu0 %v484
        %532 = vmatprep.subr.bf16.mxu0 0
        %533 = vmatpush2.bf16.msra.mxu0 %v499
        %534 = vmatprep.subr.bf16.mxu0 0
        %535 = vmatpush2.bf16.msra.mxu0 %v498
        %536 = vmatprep.subr.bf16.mxu0 0
        %537 = vmatpush2.bf16.msra.mxu0 %v497
        %538 = vmatprep.subr.bf16.mxu0 0
        %539 = vmatpush2.bf16.msra.mxu0 %v496
        %540 = vmatprep.subr.bf16.mxu0 0
        %541 = vmatpush2.bf16.msra.mxu0 %v495
        %542 = vmatprep.subr.bf16.mxu0 0
        %543 = vmatpush2.bf16.msra.mxu0 %v494
        %544 = vmatprep.subr.bf16.mxu0 0
        %545 = vmatpush2.bf16.msra.mxu0 %v493
        %546 = vmatprep.subr.bf16.mxu0 0
        %547 = vmatpush2.bf16.msra.mxu0 %v492
        %548 = vmatprep.mubr.bf16.mxu0 %v405
        %549 = vmatmul.mubr.bf16.gmra.mxu0 %v404
        %v550 = vpop.f32.mrf.mxu0
        %v551 = vadd.f32 0.0, %v550
        %v552 = vpop.f32.mrf.mxu0
        %v553 = vpop.f32.mrf.mxu0
        %v554 = vadd.f32 0.0, %v553
        %v555 = vpop.f32.mrf.mxu0
        %556 = vmatprep.mubr.bf16.mxu0 %v407
        %557 = vmatmul.mubr.bf16.gmra.mxu0 %v406
        %v558 = vpop.f32.mrf.mxu0
        %v559 = vadd.f32 0.0, %v558
        %v560 = vpop.f32.mrf.mxu0
        %v561 = vpop.f32.mrf.mxu0
        %v562 = vadd.f32 0.0, %v561
        %v563 = vpop.f32.mrf.mxu0
        %564 = vmatprep.mubr.bf16.mxu0 %v409
        %565 = vmatmul.mubr.bf16.gmra.mxu0 %v408
        %v566 = vpop.f32.mrf.mxu0
        %v567 = vadd.f32 0.0, %v566
        %v568 = vpop.f32.mrf.mxu0
        %v569 = vpop.f32.mrf.mxu0
        %v570 = vadd.f32 0.0, %v569
        %v571 = vpop.f32.mrf.mxu0
        %572 = vmatprep.mubr.bf16.mxu0 %v411
        %573 = vmatmul.mubr.bf16.gmra.mxu0 %v410
        %v574 = vpop.f32.mrf.mxu0
        %v575 = vadd.f32 0.0, %v574
        %v576 = vpop.f32.mrf.mxu0
        %v577 = vpop.f32.mrf.mxu0
        %v578 = vadd.f32 0.0, %v577
        %v579 = vpop.f32.mrf.mxu0
        %580 = vdwg.mxu0
        %v581 = vld [vmem:[%s2] sm:$0x1]
        %v583 = vlaneseq
        %v584 = vshrl.u32 %v583, 7
        %v585 = vsub.s32 0, %v584
        %v586 = vrot.slane %v581, %v585
        %v588 = vmul.f32 %v551, %v586
        %v589 = vmul.f32 %v554, %v586
        %v590 = vmul.f32 %v559, %v586
        %v591 = vmul.f32 %v562, %v586
        %v592 = vmul.f32 %v567, %v586
        %v593 = vmul.f32 %v570, %v586
        %v594 = vmul.f32 %v575, %v586
        %v595 = vmul.f32 %v578, %v586
        %v596 = vld [vmem:[%s3] sm:$0x1]
        %v598 = vlaneseq
        %v599 = vshrl.u32 %v598, 7
        %v600 = vsub.s32 0, %v599
        %v601 = vrot.slane %v596, %v600
        %v603 = vadd.f32 %v588, %v601
        %v604 = vadd.f32 %v589, %v601
        %v605 = vadd.f32 %v590, %v601
        %v606 = vadd.f32 %v591, %v601
        %v607 = vadd.f32 %v592, %v601
        %v608 = vadd.f32 %v593, %v601
        %v609 = vadd.f32 %v594, %v601
        %v610 = vadd.f32 %v595, %v601
        %v611 = vmax.f32 %v603, 0.0
        %v612 = vmax.f32 %v604, 0.0
        %v613 = vmax.f32 %v605, 0.0
        %v614 = vmax.f32 %v606, 0.0
        %v615 = vmax.f32 %v607, 0.0
        %v616 = vmax.f32 %v608, 0.0
        %v617 = vmax.f32 %v609, 0.0
        %v618 = vmax.f32 %v610, 0.0
        %v619 = vld [vmem:[#allocation2] sm:$0x1]
        %v620 = vadd.f32 %v611, %v612
        %v621 = vadd.f32 %v620, %v613
        %v622 = vadd.f32 %v621, %v614
        %v623 = vadd.f32 %v622, %v615
        %v624 = vadd.f32 %v623, %v616
        %v625 = vadd.f32 %v624, %v617
        %v626 = vadd.f32 %v625, %v618
        %v627 = vrot.slane %v626, 4
        %v628 = vadd.f32 %v626, %v627
        %v629 = vrot.slane %v628, 2
        %v630 = vadd.f32 %v628, %v629
        %v631 = vrot.slane %v630, 1
        %v632 = vadd.f32 %v630, %v631
        %v633 = vadd.f32 %v619, %v632
        %634 = vst [vmem:[#allocation2] sm:$0x1] %v633
        // Predicated region
        $region57: #{net_forward.1} parent=51 // pred_check
          %p635 = pneg %p335
        $region58: #{net_forward.1} parent=51 // pred_check_branch
          %637 = sbr.rel (%p635) target = $region60
        $region59: #{net_forward.1} parent=51 // pred_region
          %v638 = vld [vmem:[#allocation2] sm:$0x1]
          %v639 = vmul.f32 %v638, 0.015625
          %v640 = vld [vmem:[%s4] sm:$0xff]
          %v641 = vld [vmem:[%s4 + $0x8] sm:$0xff]
          %v642 = vld [vmem:[%s4 + $0x10] sm:$0xff]
          %v643 = vld [vmem:[%s4 + $0x18] sm:$0xff]
          %v644 = vld [vmem:[%s4 + $0x20] sm:$0xff]
          %v645 = vld [vmem:[%s4 + $0x28] sm:$0xff]
          %v646 = vld [vmem:[%s4 + $0x30] sm:$0xff]
          %v647 = vld [vmem:[%s4 + $0x38] sm:$0xff]
          %v648 = vld [vmem:[%s4 + $0x40] sm:$0xff]
          %v649 = vld [vmem:[%s4 + $0x48] sm:$0xff]
          %v650 = vld [vmem:[%s4 + $0x50] sm:$0xff]
          %v651 = vld [vmem:[%s4 + $0x58] sm:$0xff]
          %v652 = vld [vmem:[%s4 + $0x60] sm:$0xff]
          %v653 = vld [vmem:[%s4 + $0x68] sm:$0xff]
          %v654 = vld [vmem:[%s4 + $0x70] sm:$0xff]
          %v655 = vld [vmem:[%s4 + $0x78] sm:$0xff]
          %v656 = vld [vmem:[%s4 + $0x80] sm:$0xff]
          %v657 = vld [vmem:[%s4 + $0x88] sm:$0xff]
          %v658 = vld [vmem:[%s4 + $0x90] sm:$0xff]
          %v659 = vld [vmem:[%s4 + $0x98] sm:$0xff]
          %v660 = vld [vmem:[%s4 + $0xa0] sm:$0xff]
          %v661 = vld [vmem:[%s4 + $0xa8] sm:$0xff]
          %v662 = vld [vmem:[%s4 + $0xb0] sm:$0xff]
          %v663 = vld [vmem:[%s4 + $0xb8] sm:$0xff]
          %v664 = vld [vmem:[%s4 + $0xc0] sm:$0xff]
          %v665 = vld [vmem:[%s4 + $0xc8] sm:$0xff]
          %v666 = vld [vmem:[%s4 + $0xd0] sm:$0xff]
          %v667 = vld [vmem:[%s4 + $0xd8] sm:$0xff]
          %v668 = vld [vmem:[%s4 + $0xe0] sm:$0xff]
          %v669 = vld [vmem:[%s4 + $0xe8] sm:$0xff]
          %v670 = vld [vmem:[%s4 + $0xf0] sm:$0xff]
          %v671 = vld [vmem:[%s4 + $0xf8] sm:$0xff]
          %v672 = vld [vmem:[%s4 + $0x100] sm:$0xff]
          %v673 = vld [vmem:[%s4 + $0x108] sm:$0xff]
          %v674 = vld [vmem:[%s4 + $0x110] sm:$0xff]
          %v675 = vld [vmem:[%s4 + $0x118] sm:$0xff]
          %v676 = vld [vmem:[%s4 + $0x120] sm:$0xff]
          %v677 = vld [vmem:[%s4 + $0x128] sm:$0xff]
          %v678 = vld [vmem:[%s4 + $0x130] sm:$0xff]
          %v679 = vld [vmem:[%s4 + $0x138] sm:$0xff]
          %v680 = vld [vmem:[%s4 + $0x140] sm:$0xff]
          %v681 = vld [vmem:[%s4 + $0x148] sm:$0xff]
          %v682 = vld [vmem:[%s4 + $0x150] sm:$0xff]
          %v683 = vld [vmem:[%s4 + $0x158] sm:$0xff]
          %v684 = vld [vmem:[%s4 + $0x160] sm:$0xff]
          %v685 = vld [vmem:[%s4 + $0x168] sm:$0xff]
          %v686 = vld [vmem:[%s4 + $0x170] sm:$0xff]
          %v687 = vld [vmem:[%s4 + $0x178] sm:$0xff]
          %v688 = vld [vmem:[%s4 + $0x180] sm:$0xff]
          %v689 = vld [vmem:[%s4 + $0x188] sm:$0xff]
          %v690 = vld [vmem:[%s4 + $0x190] sm:$0xff]
          %v691 = vld [vmem:[%s4 + $0x198] sm:$0xff]
          %v692 = vld [vmem:[%s4 + $0x1a0] sm:$0xff]
          %v693 = vld [vmem:[%s4 + $0x1a8] sm:$0xff]
          %v694 = vld [vmem:[%s4 + $0x1b0] sm:$0xff]
          %v695 = vld [vmem:[%s4 + $0x1b8] sm:$0xff]
          %v696 = vld [vmem:[%s4 + $0x1c0] sm:$0xff]
          %v697 = vld [vmem:[%s4 + $0x1c8] sm:$0xff]
          %v698 = vld [vmem:[%s4 + $0x1d0] sm:$0xff]
          %v699 = vld [vmem:[%s4 + $0x1d8] sm:$0xff]
          %v700 = vld [vmem:[%s4 + $0x1e0] sm:$0xff]
          %v701 = vld [vmem:[%s4 + $0x1e8] sm:$0xff]
          %v702 = vld [vmem:[%s4 + $0x1f0] sm:$0xff]
          %v703 = vld [vmem:[%s4 + $0x1f8] sm:$0xff]
          %v704 = vld [vmem:[%s5] sm:$0xf]
          %v706 = vlaneseq
          %v707 = vshrl.u32 %v706, 7
          %v708 = vsub.s32 0, %v707
          %v709 = vrot.slane %v704, %v708
          %v710 = vlaneseq
          %v711 = vshrl.u32 %v710, 7
          %v712 = vsub.s32 1, %v711
          %v713 = vrot.slane %v704, %v712
          %v714 = vlaneseq
          %v715 = vshrl.u32 %v714, 7
          %v716 = vsub.s32 2, %v715
          %v717 = vrot.slane %v704, %v716
          %v718 = vlaneseq
          %v719 = vshrl.u32 %v718, 7
          %v720 = vsub.s32 3, %v719
          %v721 = vrot.slane %v704, %v720
          %726 = vmatprep.subr.mxu0 %v701
          %727 = vmatpush1.msra.mxu0 %v700
          %728 = vmatprep.subr.mxu0 %v697
          %729 = vmatpush1.msra.mxu0 %v696
          %730 = vmatprep.subr.mxu0 %v693
          %731 = vmatpush1.msra.mxu0 %v692
          %732 = vmatprep.subr.mxu0 %v689
          %733 = vmatpush1.msra.mxu0 %v688
          %734 = vmatprep.subr.mxu0 %v685
          %735 = vmatpush1.msra.mxu0 %v684
          %736 = vmatprep.subr.mxu0 %v681
          %737 = vmatpush1.msra.mxu0 %v680
          %738 = vmatprep.subr.mxu0 %v677
          %739 = vmatpush1.msra.mxu0 %v676
          %740 = vmatprep.subr.mxu0 %v673
          %741 = vmatpush1.msra.mxu0 %v672
          %742 = vmatprep.subr.mxu0 %v669
          %743 = vmatpush1.msra.mxu0 %v668
          %744 = vmatprep.subr.mxu0 %v665
          %745 = vmatpush1.msra.mxu0 %v664
          %746 = vmatprep.subr.mxu0 %v661
          %747 = vmatpush1.msra.mxu0 %v660
          %748 = vmatprep.subr.mxu0 %v657
          %749 = vmatpush1.msra.mxu0 %v656
          %750 = vmatprep.subr.mxu0 %v653
          %751 = vmatpush1.msra.mxu0 %v652
          %752 = vmatprep.subr.mxu0 %v649
          %753 = vmatpush1.msra.mxu0 %v648
          %754 = vmatprep.subr.mxu0 %v645
          %755 = vmatpush1.msra.mxu0 %v644
          %756 = vmatprep.subr.mxu0 %v641
          %757 = vmatpush1.msra.mxu0 %v640
          %758 = vmatprep.subr.mxu0 0.0
          %759 = vmatpush2.msra.mxu0 0.0
          %760 = vmatprep.subr.mxu0 0.0
          %761 = vmatpush2.msra.mxu0 0.0
          %762 = vmatprep.subr.mxu0 0.0
          %763 = vmatpush2.msra.mxu0 0.0
          %764 = vmatprep.subr.mxu0 0.0
          %765 = vmatpush2.msra.mxu0 0.0
          %766 = vmatprep.subr.mxu0 0.0
          %767 = vmatpush2.msra.mxu0 0.0
          %768 = vmatprep.subr.mxu0 0.0
          %769 = vmatpush2.msra.mxu0 0.0
          %770 = vmatprep.subr.mxu0 0.0
          %771 = vmatpush2.msra.mxu0 0.0
          %772 = vmatprep.subr.mxu0 0.0
          %773 = vmatpush2.msra.mxu0 0.0
          %774 = vmatprep.subr.mxu0 0.0
          %775 = vmatpush2.msra.mxu0 0.0
          %776 = vmatprep.subr.mxu0 0.0
          %777 = vmatpush2.msra.mxu0 0.0
          %778 = vmatprep.subr.mxu0 0.0
          %779 = vmatpush2.msra.mxu0 0.0
          %780 = vmatprep.subr.mxu0 0.0
          %781 = vmatpush2.msra.mxu0 0.0
          %782 = vmatprep.subr.mxu0 0.0
          %783 = vmatpush2.msra.mxu0 0.0
          %784 = vmatprep.subr.mxu0 0.0
          %785 = vmatpush2.msra.mxu0 0.0
          %786 = vmatprep.subr.mxu0 0.0
          %787 = vmatpush2.msra.mxu0 0.0
          %788 = vmatprep.subr.mxu0 0.0
          %789 = vmatpush2.msra.mxu0 0.0
          %790 = vmatprep.mubr.f32.mxu0 0.0
          %791 = vmatmul.mubr.f32.gmra.mxu0 %v639
          %v792 = vpop.f32.mrf.mxu0
          %v793 = vadd.f32 %v709, %v792
          %v794 = vpop.f32.mrf.mxu0
          %v795 = vadd.f32 %v713, %v794
          %796 = vdwg.mxu0
          %797 = vmatprep.subr.mxu0 %v703
          %798 = vmatpush1.msra.mxu0 %v702
          %799 = vmatprep.subr.mxu0 %v699
          %800 = vmatpush1.msra.mxu0 %v698
          %801 = vmatprep.subr.mxu0 %v695
          %802 = vmatpush1.msra.mxu0 %v694
          %803 = vmatprep.subr.mxu0 %v691
          %804 = vmatpush1.msra.mxu0 %v690
          %805 = vmatprep.subr.mxu0 %v687
          %806 = vmatpush1.msra.mxu0 %v686
          %807 = vmatprep.subr.mxu0 %v683
          %808 = vmatpush1.msra.mxu0 %v682
          %809 = vmatprep.subr.mxu0 %v679
          %810 = vmatpush1.msra.mxu0 %v678
          %811 = vmatprep.subr.mxu0 %v675
          %812 = vmatpush1.msra.mxu0 %v674
          %813 = vmatprep.subr.mxu0 %v671
          %814 = vmatpush1.msra.mxu0 %v670
          %815 = vmatprep.subr.mxu0 %v667
          %816 = vmatpush1.msra.mxu0 %v666
          %817 = vmatprep.subr.mxu0 %v663
          %818 = vmatpush1.msra.mxu0 %v662
          %819 = vmatprep.subr.mxu0 %v659
          %820 = vmatpush1.msra.mxu0 %v658
          %821 = vmatprep.subr.mxu0 %v655
          %822 = vmatpush1.msra.mxu0 %v654
          %823 = vmatprep.subr.mxu0 %v651
          %824 = vmatpush1.msra.mxu0 %v650
          %825 = vmatprep.subr.mxu0 %v647
          %826 = vmatpush1.msra.mxu0 %v646
          %827 = vmatprep.subr.mxu0 %v643
          %828 = vmatpush1.msra.mxu0 %v642
          %829 = vmatprep.subr.mxu0 0.0
          %830 = vmatpush2.msra.mxu0 0.0
          %831 = vmatprep.subr.mxu0 0.0
          %832 = vmatpush2.msra.mxu0 0.0
          %833 = vmatprep.subr.mxu0 0.0
          %834 = vmatpush2.msra.mxu0 0.0
          %835 = vmatprep.subr.mxu0 0.0
          %836 = vmatpush2.msra.mxu0 0.0
          %837 = vmatprep.subr.mxu0 0.0
          %838 = vmatpush2.msra.mxu0 0.0
          %839 = vmatprep.subr.mxu0 0.0
          %840 = vmatpush2.msra.mxu0 0.0
          %841 = vmatprep.subr.mxu0 0.0
          %842 = vmatpush2.msra.mxu0 0.0
          %843 = vmatprep.subr.mxu0 0.0
          %844 = vmatpush2.msra.mxu0 0.0
          %845 = vmatprep.subr.mxu0 0.0
          %846 = vmatpush2.msra.mxu0 0.0
          %847 = vmatprep.subr.mxu0 0.0
          %848 = vmatpush2.msra.mxu0 0.0
          %849 = vmatprep.subr.mxu0 0.0
          %850 = vmatpush2.msra.mxu0 0.0
          %851 = vmatprep.subr.mxu0 0.0
          %852 = vmatpush2.msra.mxu0 0.0
          %853 = vmatprep.subr.mxu0 0.0
          %854 = vmatpush2.msra.mxu0 0.0
          %855 = vmatprep.subr.mxu0 0.0
          %856 = vmatpush2.msra.mxu0 0.0
          %857 = vmatprep.subr.mxu0 0.0
          %858 = vmatpush2.msra.mxu0 0.0
          %859 = vmatprep.subr.mxu0 0.0
          %860 = vmatpush2.msra.mxu0 0.0
          %861 = vmatprep.mubr.f32.mxu0 0.0
          %862 = vmatmul.mubr.f32.gmra.mxu0 %v639
          %v863 = vpop.f32.mrf.mxu0
          %v864 = vadd.f32 %v717, %v863
          %v865 = vpop.f32.mrf.mxu0
          %v866 = vadd.f32 %v721, %v865
          %867 = vdwg.mxu0
          %v868 = vmax.f32 %v793, 0.0
          %v869 = vmax.f32 %v795, 0.0
          %v870 = vmax.f32 %v864, 0.0
          %v871 = vmax.f32 %v866, 0.0
          %v872 = vld [vmem:[%s6] sm:$0xff]
          %v873 = vld [vmem:[%s6 + $0x8] sm:$0xff]
          %v874 = vld [vmem:[%s6 + $0x10] sm:$0xff]
          %v875 = vld [vmem:[%s6 + $0x18] sm:$0xff]
          %v876 = vld [vmem:[%s6 + $0x20] sm:$0xff]
          %v877 = vld [vmem:[%s6 + $0x28] sm:$0xff]
          %v878 = vld [vmem:[%s6 + $0x30] sm:$0xff]
          %v879 = vld [vmem:[%s6 + $0x38] sm:$0xff]
          %v880 = vld [vmem:[%s6 + $0x40] sm:$0xff]
          %v881 = vld [vmem:[%s6 + $0x48] sm:$0xff]
          %v882 = vld [vmem:[%s6 + $0x50] sm:$0xff]
          %v883 = vld [vmem:[%s6 + $0x58] sm:$0xff]
          %v884 = vld [vmem:[%s6 + $0x60] sm:$0xff]
          %v885 = vld [vmem:[%s6 + $0x68] sm:$0xff]
          %v886 = vld [vmem:[%s6 + $0x70] sm:$0xff]
          %v887 = vld [vmem:[%s6 + $0x78] sm:$0xff]
          %v888 = vld [vmem:[%s6 + $0x80] sm:$0xff]
          %v889 = vld [vmem:[%s6 + $0x88] sm:$0xff]
          %v890 = vld [vmem:[%s6 + $0x90] sm:$0xff]
          %v891 = vld [vmem:[%s6 + $0x98] sm:$0xff]
          %v892 = vld [vmem:[%s6 + $0xa0] sm:$0xff]
          %v893 = vld [vmem:[%s6 + $0xa8] sm:$0xff]
          %v894 = vld [vmem:[%s6 + $0xb0] sm:$0xff]
          %v895 = vld [vmem:[%s6 + $0xb8] sm:$0xff]
          %v896 = vld [vmem:[%s6 + $0xc0] sm:$0xff]
          %v897 = vld [vmem:[%s6 + $0xc8] sm:$0xff]
          %v898 = vld [vmem:[%s6 + $0xd0] sm:$0xff]
          %v899 = vld [vmem:[%s6 + $0xd8] sm:$0xff]
          %v900 = vld [vmem:[%s6 + $0xe0] sm:$0xff]
          %v901 = vld [vmem:[%s6 + $0xe8] sm:$0xff]
          %v902 = vld [vmem:[%s6 + $0xf0] sm:$0xff]
          %v903 = vld [vmem:[%s6 + $0xf8] sm:$0xff]
          %v904 = vld [vmem:[%s6 + $0x100] sm:$0xff]
          %v905 = vld [vmem:[%s6 + $0x108] sm:$0xff]
          %v906 = vld [vmem:[%s6 + $0x110] sm:$0xff]
          %v907 = vld [vmem:[%s6 + $0x118] sm:$0xff]
          %v908 = vld [vmem:[%s6 + $0x120] sm:$0xff]
          %v909 = vld [vmem:[%s6 + $0x128] sm:$0xff]
          %v910 = vld [vmem:[%s6 + $0x130] sm:$0xff]
          %v911 = vld [vmem:[%s6 + $0x138] sm:$0xff]
          %v912 = vld [vmem:[%s6 + $0x140] sm:$0xff]
          %v913 = vld [vmem:[%s6 + $0x148] sm:$0xff]
          %v914 = vld [vmem:[%s6 + $0x150] sm:$0xff]
          %v915 = vld [vmem:[%s6 + $0x158] sm:$0xff]
          %v916 = vld [vmem:[%s6 + $0x160] sm:$0xff]
          %v917 = vld [vmem:[%s6 + $0x168] sm:$0xff]
          %v918 = vld [vmem:[%s6 + $0x170] sm:$0xff]
          %v919 = vld [vmem:[%s6 + $0x178] sm:$0xff]
          %v920 = vld [vmem:[%s6 + $0x180] sm:$0xff]
          %v921 = vld [vmem:[%s6 + $0x188] sm:$0xff]
          %v922 = vld [vmem:[%s6 + $0x190] sm:$0xff]
          %v923 = vld [vmem:[%s6 + $0x198] sm:$0xff]
          %v924 = vld [vmem:[%s6 + $0x1a0] sm:$0xff]
          %v925 = vld [vmem:[%s6 + $0x1a8] sm:$0xff]
          %v926 = vld [vmem:[%s6 + $0x1b0] sm:$0xff]
          %v927 = vld [vmem:[%s6 + $0x1b8] sm:$0xff]
          %v928 = vld [vmem:[%s6 + $0x1c0] sm:$0xff]
          %v929 = vld [vmem:[%s6 + $0x1c8] sm:$0xff]
          %v930 = vld [vmem:[%s6 + $0x1d0] sm:$0xff]
          %v931 = vld [vmem:[%s6 + $0x1d8] sm:$0xff]
          %v932 = vld [vmem:[%s6 + $0x1e0] sm:$0xff]
          %v933 = vld [vmem:[%s6 + $0x1e8] sm:$0xff]
          %v934 = vld [vmem:[%s6 + $0x1f0] sm:$0xff]
          %v935 = vld [vmem:[%s6 + $0x1f8] sm:$0xff]
          %v936 = vld [vmem:[%s7] sm:$0x1]
          %937 = vmatprep.subr.mxu0 0.0
          %938 = vmatpush1.msra.mxu0 %v887
          %939 = vmatprep.subr.mxu0 0.0
          %940 = vmatpush1.msra.mxu0 %v886
          %941 = vmatprep.subr.mxu0 0.0
          %942 = vmatpush1.msra.mxu0 %v885
          %943 = vmatprep.subr.mxu0 0.0
          %944 = vmatpush1.msra.mxu0 %v884
          %945 = vmatprep.subr.mxu0 0.0
          %946 = vmatpush1.msra.mxu0 %v883
          %947 = vmatprep.subr.mxu0 0.0
          %948 = vmatpush1.msra.mxu0 %v882
          %949 = vmatprep.subr.mxu0 0.0
          %950 = vmatpush1.msra.mxu0 %v881
          %951 = vmatprep.subr.mxu0 0.0
          %952 = vmatpush1.msra.mxu0 %v880
          %953 = vmatprep.subr.mxu0 0.0
          %954 = vmatpush1.msra.mxu0 %v879
          %955 = vmatprep.subr.mxu0 0.0
          %956 = vmatpush1.msra.mxu0 %v878
          %957 = vmatprep.subr.mxu0 0.0
          %958 = vmatpush1.msra.mxu0 %v877
          %959 = vmatprep.subr.mxu0 0.0
          %960 = vmatpush1.msra.mxu0 %v876
          %961 = vmatprep.subr.mxu0 0.0
          %962 = vmatpush1.msra.mxu0 %v875
          %963 = vmatprep.subr.mxu0 0.0
          %964 = vmatpush1.msra.mxu0 %v874
          %965 = vmatprep.subr.mxu0 0.0
          %966 = vmatpush1.msra.mxu0 %v873
          %967 = vmatprep.subr.mxu0 0.0
          %968 = vmatpush1.msra.mxu0 %v872
          %969 = vmatprep.subr.mxu0 0.0
          %970 = vmatpush2.msra.mxu0 %v903
          %971 = vmatprep.subr.mxu0 0.0
          %972 = vmatpush2.msra.mxu0 %v902
          %973 = vmatprep.subr.mxu0 0.0
          %974 = vmatpush2.msra.mxu0 %v901
          %975 = vmatprep.subr.mxu0 0.0
          %976 = vmatpush2.msra.mxu0 %v900
          %977 = vmatprep.subr.mxu0 0.0
          %978 = vmatpush2.msra.mxu0 %v899
          %979 = vmatprep.subr.mxu0 0.0
          %980 = vmatpush2.msra.mxu0 %v898
          %981 = vmatprep.subr.mxu0 0.0
          %982 = vmatpush2.msra.mxu0 %v897
          %983 = vmatprep.subr.mxu0 0.0
          %984 = vmatpush2.msra.mxu0 %v896
          %985 = vmatprep.subr.mxu0 0.0
          %986 = vmatpush2.msra.mxu0 %v895
          %987 = vmatprep.subr.mxu0 0.0
          %988 = vmatpush2.msra.mxu0 %v894
          %989 = vmatprep.subr.mxu0 0.0
          %990 = vmatpush2.msra.mxu0 %v893
          %991 = vmatprep.subr.mxu0 0.0
          %992 = vmatpush2.msra.mxu0 %v892
          %993 = vmatprep.subr.mxu0 0.0
          %994 = vmatpush2.msra.mxu0 %v891
          %995 = vmatprep.subr.mxu0 0.0
          %996 = vmatpush2.msra.mxu0 %v890
          %997 = vmatprep.subr.mxu0 0.0
          %998 = vmatpush2.msra.mxu0 %v889
          %999 = vmatprep.subr.mxu0 0.0
          %1000 = vmatpush2.msra.mxu0 %v888
          %1001 = vmatprep.mubr.f32.mxu0 %v869
          %1002 = vmatmul.mubr.f32.gmra.mxu0 %v868
          %v1003 = vpop.f32.mrf.mxu0
          %v1004 = vadd.f32 %v936, %v1003
          %v1005 = vpop.f32.mrf.mxu0
          %1006 = vdwg.mxu0
          %1007 = vmatprep.subr.mxu0 0.0
          %1008 = vmatpush1.msra.mxu0 %v919
          %1009 = vmatprep.subr.mxu0 0.0
          %1010 = vmatpush1.msra.mxu0 %v918
          %1011 = vmatprep.subr.mxu0 0.0
          %1012 = vmatpush1.msra.mxu0 %v917
          %1013 = vmatprep.subr.mxu0 0.0
          %1014 = vmatpush1.msra.mxu0 %v916
          %1015 = vmatprep.subr.mxu0 0.0
          %1016 = vmatpush1.msra.mxu0 %v915
          %1017 = vmatprep.subr.mxu0 0.0
          %1018 = vmatpush1.msra.mxu0 %v914
          %1019 = vmatprep.subr.mxu0 0.0
          %1020 = vmatpush1.msra.mxu0 %v913
          %1021 = vmatprep.subr.mxu0 0.0
          %1022 = vmatpush1.msra.mxu0 %v912
          %1023 = vmatprep.subr.mxu0 0.0
          %1024 = vmatpush1.msra.mxu0 %v911
          %1025 = vmatprep.subr.mxu0 0.0
          %1026 = vmatpush1.msra.mxu0 %v910
          %1027 = vmatprep.subr.mxu0 0.0
          %1028 = vmatpush1.msra.mxu0 %v909
          %1029 = vmatprep.subr.mxu0 0.0
          %1030 = vmatpush1.msra.mxu0 %v908
          %1031 = vmatprep.subr.mxu0 0.0
          %1032 = vmatpush1.msra.mxu0 %v907
          %1033 = vmatprep.subr.mxu0 0.0
          %1034 = vmatpush1.msra.mxu0 %v906
          %1035 = vmatprep.subr.mxu0 0.0
          %1036 = vmatpush1.msra.mxu0 %v905
          %1037 = vmatprep.subr.mxu0 0.0
          %1038 = vmatpush1.msra.mxu0 %v904
          %1039 = vmatprep.subr.mxu0 0.0
          %1040 = vmatpush2.msra.mxu0 %v935
          %1041 = vmatprep.subr.mxu0 0.0
          %1042 = vmatpush2.msra.mxu0 %v934
          %1043 = vmatprep.subr.mxu0 0.0
          %1044 = vmatpush2.msra.mxu0 %v933
          %1045 = vmatprep.subr.mxu0 0.0
          %1046 = vmatpush2.msra.mxu0 %v932
          %1047 = vmatprep.subr.mxu0 0.0
          %1048 = vmatpush2.msra.mxu0 %v931
          %1049 = vmatprep.subr.mxu0 0.0
          %1050 = vmatpush2.msra.mxu0 %v930
          %1051 = vmatprep.subr.mxu0 0.0
          %1052 = vmatpush2.msra.mxu0 %v929
          %1053 = vmatprep.subr.mxu0 0.0
          %1054 = vmatpush2.msra.mxu0 %v928
          %1055 = vmatprep.subr.mxu0 0.0
          %1056 = vmatpush2.msra.mxu0 %v927
          %1057 = vmatprep.subr.mxu0 0.0
          %1058 = vmatpush2.msra.mxu0 %v926
          %1059 = vmatprep.subr.mxu0 0.0
          %1060 = vmatpush2.msra.mxu0 %v925
          %1061 = vmatprep.subr.mxu0 0.0
          %1062 = vmatpush2.msra.mxu0 %v924
          %1063 = vmatprep.subr.mxu0 0.0
          %1064 = vmatpush2.msra.mxu0 %v923
          %1065 = vmatprep.subr.mxu0 0.0
          %1066 = vmatpush2.msra.mxu0 %v922
          %1067 = vmatprep.subr.mxu0 0.0
          %1068 = vmatpush2.msra.mxu0 %v921
          %1069 = vmatprep.subr.mxu0 0.0
          %1070 = vmatpush2.msra.mxu0 %v920
          %1071 = vmatprep.mubr.f32.mxu0 %v871
          %1072 = vmatmul.mubr.f32.gmra.mxu0 %v870
          %v1073 = vpop.f32.mrf.mxu0
          %v1074 = vadd.f32 %v1004, %v1073
          %v1075 = vpop.f32.mrf.mxu0
          %1076 = vdwg.mxu0
          %1077 = vst [vmem:[%s322] sm:$0x1] %v1074
        $region60: #{net_forward.1} parent=51 // pred_fallthru
          _
        %s1078 = sand.u32 %s217, 1
        %s1079 = scalar_lea.sflag [#allocation4], %s1078
        %s1080 = sand.u32 %s217, 1
        %s1081 = scalar_lea.vmem [#allocation3], %s1080
        // Predicated region
        $region61: #{net_forward.1} parent=51 // pred_check
          %p1082 = pneg %p227
        $region62: #{net_forward.1} parent=51 // pred_check_branch
          %1084 = sbr.rel (%p1082) target = $region64
        $region63: #{net_forward.1} parent=51 // pred_region
          %s1086 = ssub.s32 16, 16
          %1087 = vsyncadd %s1079, %s1086
          %s1088 = smul.addr %s26, 16
          %s1089 = scalar_lea.hbm %s8, %s1088
          %s1091 = sshll.u32 %s1081, 4
          %s1092 = int_to_ptr.vmem [resolvable:$true] %s1091
          %1094 = dma.vmem_to_hbm [thread:$0]  %s1092, 16, %s1089, %s1079
        $region64: #{net_forward.1} parent=51 // pred_fallthru
          _
      $region52: #{net_forward.1} parent=5 // pred_fallthru
        _
      %p1095 = scmp.le.s32.totalorder 2, %s17
      // Predicated region
      $region65: #{net_forward.1} parent=5 // pred_check
        %p1096 = pneg %p1095
      $region66: #{net_forward.1} parent=5 // pred_check_branch
        %1098 = sbr.rel (%p1096) target = $region68
      $region67: #{net_forward.1} parent=5 // pred_region
        %s1099 = ssub.s32 %s17, 2
        // Predicated region
        $region69: #{net_forward.1} parent=67 // pred_check
          %p1100 = pneg %p233
        $region70: #{net_forward.1} parent=67 // pred_check_branch
          %1102 = sbr.rel (%p1100) target = $region72
        $region71: #{net_forward.1} parent=67 // pred_region
          %s1103 = sand.u32 %s218, 1
          %s1104 = scalar_lea.sflag [#allocation4], %s1103
          %s1105 = sand.u32 %s218, 1
          %s1106 = scalar_lea.vmem [#allocation3], %s1105
          %1107 = dma.done %s1104, 16
        $region72: #{net_forward.1} parent=67 // pred_fallthru
          _
      $region68: #{net_forward.1} parent=5 // pred_fallthru
        _
    $region6: #{net_forward.1} parent=1 // loop_footer
      %s21 = sadd.s32 1, %s17
    $region7: #{net_forward.1} parent=1 // loop_footer_branch
      %16 = sbr.rel target = $region3
    $region8: #{net_forward.1} parent=1 // loop_exit
      _
    %1108 = vsyncpa [#allocation4], 1
    %s1109 = scalar_lea.sflag [#allocation4], 1
    %1110 = vsyncpa %s1109, 1

</llo_original>
